<compile_context>
chip_gen: v6e
topology: v6e:2x2x1
jax: 0.10.0
libtpu: 0.0.40
codegen_flags: <defaults>
</compile_context>

<pallas_src>
from functools import partial

import jax
import jax.numpy as jnp
from jax.experimental import pallas as pl
from jax.experimental.pallas import tpu as pltpu


# --------------------------------------------------------------------------- #
# Kernel 1/3 and 3/3: tiled linear  y = x @ w + b  with f32 MXU accumulation
# --------------------------------------------------------------------------- #
def _linear_kernel(x_ref, w_ref, b_ref, o_ref, acc_ref):
    k = pl.program_id(2)

    @pl.when(k == 0)
    def _init():
        acc_ref[...] = jnp.zeros_like(acc_ref)

    acc_ref[...] += jnp.dot(x_ref[...], w_ref[...],
                            preferred_element_type=jnp.float32)

    @pl.when(k == pl.num_programs(2) - 1)
    def _finalize():
        o_ref[...] = (acc_ref[...]
                      + b_ref[...].astype(jnp.float32)).astype(o_ref.dtype)


def _pick_tile(dim, target, align):
    """Largest `align`-multiple tile <= target that evenly divides `dim`,
    else fall back to the full extent (full-extent blocks are always legal)."""
    if dim <= target:
        return dim
    t = (target // align) * align
    while t >= align:
        if dim % t == 0:
            return t
        t -= align
    return dim


def linear_pallas(x2d, w, b, *, tm=256, tn=256, tk=512):
    """x2d: (M, K), w: (K, Nout), b: (Nout,) or None  ->  (M, Nout)."""
    M, K = x2d.shape
    _, Nout = w.shape
    tm = _pick_tile(M, tm, 8)        # sublane dim of x / out
    tn = _pick_tile(Nout, tn, 128)   # lane dim of w / out
    tk = _pick_tile(K, tk, 128)      # lane dim of x, sublane dim of w
    if b is None:
        b = jnp.zeros((Nout,), x2d.dtype)
    b2 = b.reshape(1, Nout).astype(x2d.dtype)

    return pl.pallas_call(
        _linear_kernel,
        out_shape=jax.ShapeDtypeStruct((M, Nout), x2d.dtype),
        grid_spec=pltpu.PrefetchScalarGridSpec(
            num_scalar_prefetch=0,
            grid=(M // tm, Nout // tn, K // tk),
            in_specs=[
                pl.BlockSpec((tm, tk), lambda i, j, k: (i, k)),
                pl.BlockSpec((tk, tn), lambda i, j, k: (k, j)),
                pl.BlockSpec((1, tn), lambda i, j, k: (0, j)),
            ],
            out_specs=pl.BlockSpec((tm, tn), lambda i, j, k: (i, j)),
            scratch_shapes=[pltpu.VMEM((tm, tn), jnp.float32)],
        ),
        compiler_params=pltpu.CompilerParams(
            dimension_semantics=("parallel", "parallel", "arbitrary")),
    )(x2d, w, b2)


# --------------------------------------------------------------------------- #
# Kernel 2/3: fused softmax attention — one batch (all heads) per grid step.
# q/k/v blocks are (H, N, Dh); the (H, N, N) logits stay resident in VMEM.
# --------------------------------------------------------------------------- #
def _attn_kernel(q_ref, k_ref, v_ref, bias_ref, o_ref, *, scale):
    q = q_ref[...].astype(jnp.float32) * scale            # (H, N, Dh)
    k = k_ref[...].astype(jnp.float32)                    # (H, N, Dh)
    v = v_ref[...].astype(jnp.float32)                    # (H, N, Dh)
    s = jnp.einsum("hqd,hkd->hqk", q, k,
                   preferred_element_type=jnp.float32)    # (H, N, N)
    s = s + bias_ref[...].astype(jnp.float32)
    s = s - jnp.max(s, axis=-1, keepdims=True)
    p = jnp.exp(s)
    # Reciprocal on the small (H, N, 1) denominator, broadcast multiply.
    p = p * (1.0 / jnp.sum(p, axis=-1, keepdims=True))
    o_ref[...] = jnp.einsum("hqk,hkd->hqd", p, v,
                            preferred_element_type=jnp.float32).astype(o_ref.dtype)


def _attention_core(q, k, v, attn_bias, *, scale):
    """q, k, v: (B, H, N, Dh); attn_bias: (H, N, N) -> (B, H, N, Dh)."""
    B, H, N, Dh = q.shape
    qkv_spec = pl.BlockSpec((None, H, N, Dh), lambda b: (b, 0, 0, 0))
    return pl.pallas_call(
        partial(_attn_kernel, scale=scale),
        out_shape=jax.ShapeDtypeStruct((B, H, N, Dh), q.dtype),
        grid_spec=pltpu.PrefetchScalarGridSpec(
            num_scalar_prefetch=0,
            grid=(B,),
            in_specs=[
                qkv_spec,
                qkv_spec,
                qkv_spec,
                pl.BlockSpec((H, N, N), lambda b: (0, 0, 0)),
            ],
            out_specs=qkv_spec,
        ),
        compiler_params=pltpu.CompilerParams(
            dimension_semantics=("parallel",)),
    )(q, k, v, attn_bias)


# --------------------------------------------------------------------------- #
# Wrapper-side glue: window relative-position bias (table gather, as in torch)
# --------------------------------------------------------------------------- #
def build_window_relative_position_bias(table, window_size):
    """table: (num_relative_distance, H)  ->  (H, Wh*Ww+1, Wh*Ww+1)."""
    Wh, Ww = window_size
    num_rel = (2 * Wh - 1) * (2 * Ww - 1) + 3
    coords = jnp.stack(jnp.meshgrid(jnp.arange(Wh), jnp.arange(Ww), indexing="ij"))
    coords_flat = coords.reshape(2, -1)                                   # (2, P)
    rel = coords_flat[:, :, None] - coords_flat[:, None, :]               # (2, P, P)
    rel = rel.transpose(1, 2, 0)                                          # (P, P, 2)
    rel = rel.at[:, :, 0].add(Wh - 1)
    rel = rel.at[:, :, 1].add(Ww - 1)
    rel = rel.at[:, :, 0].multiply(2 * Ww - 1)
    P = Wh * Ww
    idx = jnp.zeros((P + 1, P + 1), dtype=jnp.int32)
    idx = idx.at[1:, 1:].set(rel.sum(-1))
    idx = idx.at[0, :].set(num_rel - 3)
    idx = idx.at[:, 0].set(num_rel - 2)
    idx = idx.at[0, 0].set(num_rel - 1)
    bias = table[idx.reshape(-1)].reshape(P + 1, P + 1, -1)               # (N, N, H)
    return bias.transpose(2, 0, 1)                                        # (H, N, N)


# --------------------------------------------------------------------------- #
# Full module forward
# --------------------------------------------------------------------------- #
def attention_forward(x, qkv_w, q_bias, v_bias, proj_w, proj_b, *,
                      num_heads, scale, window_bias=None, rel_pos_bias=None):
    """x: (B, N, C).  qkv_w: (3*AH, C) torch layout.  proj_w: (C, AH).
    window_bias / rel_pos_bias: optional (H, N, N) additive logit biases."""
    B, N, C = x.shape
    AH = qkv_w.shape[0] // 3
    Dh = AH // num_heads

    if q_bias is not None:
        qkv_b = jnp.concatenate([q_bias, jnp.zeros_like(v_bias), v_bias])
    else:
        qkv_b = None

    # 1) fused QKV projection
    qkv = linear_pallas(x.reshape(B * N, C), qkv_w.T, qkv_b)              # (B*N, 3*AH)
    qkv = qkv.reshape(B, N, 3, num_heads, Dh).transpose(2, 0, 3, 1, 4)    # (3, B, H, N, Dh)
    q, k, v = qkv[0], qkv[1], qkv[2]

    attn_bias = jnp.zeros((num_heads, N, N), x.dtype)
    if window_bias is not None:
        attn_bias = attn_bias + window_bias.astype(x.dtype)
    if rel_pos_bias is not None:
        attn_bias = attn_bias + rel_pos_bias.astype(x.dtype)

    # 2) fused softmax attention (all heads batched per grid step)
    ctx = _attention_core(q, k, v, attn_bias, scale=scale)                # (B, H, N, Dh)
    ctx = ctx.transpose(0, 2, 1, 3).reshape(B * N, AH)

    # 3) output projection
    # TODO(synk): attn_drop / proj_drop with p > 0 (training-time dropout) not
    # implemented; module defaults are 0.0 (identity).
    out = linear_pallas(ctx, proj_w.T, proj_b)
    return out.reshape(B, N, C)


# --------------------------------------------------------------------------- #
# Pure-JAX reference (mirrors the torch forward exactly)
# --------------------------------------------------------------------------- #
def attention_ref(x, qkv_w, q_bias, v_bias, proj_w, proj_b, *,
                  num_heads, scale, window_bias=None, rel_pos_bias=None):
    B, N, C = x.shape
    if q_bias is not None:
        qkv_b = jnp.concatenate([q_bias, jnp.zeros_like(v_bias), v_bias])
        qkv = x @ qkv_w.T + qkv_b
    else:
        qkv = x @ qkv_w.T
    qkv = qkv.reshape(B, N, 3, num_heads, -1).transpose(2, 0, 3, 1, 4)
    q, k, v = qkv[0], qkv[1], qkv[2]
    q = q * scale
    attn = q @ jnp.swapaxes(k, -2, -1)
    if window_bias is not None:
        attn = attn + window_bias[None]
    if rel_pos_bias is not None:
        attn = attn + rel_pos_bias[None]
    attn = jax.nn.softmax(attn, axis=-1)
    out = (attn @ v).transpose(0, 2, 1, 3).reshape(B, N, -1)
    return out @ proj_w.T + proj_b


if __name__ == "__main__":
    key = jax.random.PRNGKey(0)
    ks = jax.random.split(key, 7)

    # Small shapes consistent with the module: window (2, 3) -> N = 2*3 + 1 = 7 tokens.
    B, C, H = 2, 32, 4
    window = (2, 3)
    N = window[0] * window[1] + 1
    Dh = C // H
    AH = Dh * H
    scale = Dh ** -0.5
    num_rel = (2 * window[0] - 1) * (2 * window[1] - 1) + 3

    x = jax.random.normal(ks[0], (B, N, C), jnp.float32)
    qkv_w = jax.random.normal(ks[1], (3 * AH, C), jnp.float32) * 0.1
    q_bias = jax.random.normal(ks[2], (AH,), jnp.float32) * 0.1
    v_bias = jax.random.normal(ks[3], (AH,), jnp.float32) * 0.1
    proj_w = jax.random.normal(ks[4], (C, AH), jnp.float32) * 0.1
    proj_b = jax.random.normal(ks[5], (C,), jnp.float32) * 0.1
    rel_table = jax.random.normal(ks[6], (num_rel, H), jnp.float32) * 0.1

    window_bias = build_window_relative_position_bias(rel_table, window)   # (H, N, N)

    out = attention_forward(x, qkv_w, q_bias, v_bias, proj_w, proj_b,
                            num_heads=H, scale=scale, window_bias=window_bias)
    out = jax.block_until_ready(out)

    ref = attention_ref(x, qkv_w, q_bias, v_bias, proj_w, proj_b,
                        num_heads=H, scale=scale, window_bias=window_bias)

    assert out.shape == (B, N, C) and out.dtype == x.dtype
    assert jnp.allclose(out, ref, rtol=1e-3, atol=1e-3), (
        f"mismatch vs reference, max abs diff = {jnp.max(jnp.abs(out - ref))}")

    print("KERNEL_OK")
</pallas_src>

<mosaic_0001>
module attributes {stable_mosaic.version = 11 : i64} {
  func.func @_linear_kernel(%arg0: i32, %arg1: i32, %arg2: i32, %arg3: memref<14x32xf32, #tpu.memory_space<vmem>>, %arg4: memref<32x96xf32, #tpu.memory_space<vmem>>, %arg5: memref<1x96xf32, #tpu.memory_space<vmem>>, %arg6: memref<14x96xf32, #tpu.memory_space<vmem>>, %arg7: memref<14x96xf32, #tpu.memory_space<vmem>>) attributes {dimension_semantics = [#tpu.dimension_semantics<parallel>, #tpu.dimension_semantics<parallel>, #tpu.dimension_semantics<arbitrary>], iteration_bounds = array<i64: 1, 1, 1>, scalar_prefetch = 0 : i64, scratch_operands = 1 : i64, tpu.core_type = #tpu.core_type<tc>, window_params = [{transform_indices = @transform_0, window_bounds = array<i64: 14, 32>}, {transform_indices = @transform_1, window_bounds = array<i64: 32, 96>}, {transform_indices = @transform_2, window_bounds = array<i64: 1, 96>}, {transform_indices = @transform_3, window_bounds = array<i64: 14, 96>}]} {
    %c0_i32 = arith.constant 0 : i32
    %0 = arith.cmpi eq, %arg2, %c0_i32 : i32
    %1 = arith.extui %0 : i1 to i32
    %c0_i32_0 = arith.constant 0 : i32
    %2 = arith.cmpi ne, %1, %c0_i32_0 : i32
    scf.if %2 {
      %cst_10 = arith.constant 0.000000e+00 : f32
      %12 = vector.broadcast %cst_10 : f32 to vector<14x96xf32>
      %c0_11 = arith.constant 0 : index
      %c0_12 = arith.constant 0 : index
      %13 = vector.load %arg7[%c0_11, %c0_12] : memref<14x96xf32, #tpu.memory_space<vmem>>, vector<14x96xf32>
      tpu.vector_store %arg7[%c0_11, %c0_12], %12 {strides = array<i32>} : memref<14x96xf32, #tpu.memory_space<vmem>>, vector<14x96xf32>,
    } else {
    }
    %c0 = arith.constant 0 : index
    %c0_1 = arith.constant 0 : index
    %3 = vector.load %arg7[%c0, %c0_1] : memref<14x96xf32, #tpu.memory_space<vmem>>, vector<14x96xf32>
    %c0_2 = arith.constant 0 : index
    %c0_3 = arith.constant 0 : index
    %4 = vector.load %arg3[%c0_2, %c0_3] : memref<14x32xf32, #tpu.memory_space<vmem>>, vector<14x32xf32>
    %c0_4 = arith.constant 0 : index
    %c0_5 = arith.constant 0 : index
    %5 = vector.load %arg4[%c0_4, %c0_5] : memref<32x96xf32, #tpu.memory_space<vmem>>, vector<32x96xf32>
    %cst = arith.constant dense<0.000000e+00> : vector<14x96xf32>
    %6 = tpu.matmul %4, %5, %cst {dimension_numbers = #tpu.dot_dimension_numbers<[1], [0], [0], [1], [0, 0, 1, 1], [], []>} : vector<14x32xf32>, vector<32x96xf32>, vector<14x96xf32> -> vector<14x96xf32>
    %7 = arith.addf %3, %6 : vector<14x96xf32>
    %c0_6 = arith.constant 0 : index
    %c0_7 = arith.constant 0 : index
    %8 = vector.load %arg7[%c0_6, %c0_7] : memref<14x96xf32, #tpu.memory_space<vmem>>, vector<14x96xf32>
    tpu.vector_store %arg7[%c0_6, %c0_7], %7 {strides = array<i32>} : memref<14x96xf32, #tpu.memory_space<vmem>>, vector<14x96xf32>,
    %c0_i32_8 = arith.constant 0 : i32
    %9 = arith.cmpi eq, %arg2, %c0_i32_8 : i32
    %10 = arith.extui %9 : i1 to i32
    %c0_i32_9 = arith.constant 0 : i32
    %11 = arith.cmpi ne, %10, %c0_i32_9 : i32
    scf.if %11 {
      %c0_10 = arith.constant 0 : index
      %c0_11 = arith.constant 0 : index
      %12 = vector.load %arg7[%c0_10, %c0_11] : memref<14x96xf32, #tpu.memory_space<vmem>>, vector<14x96xf32>
      %c0_12 = arith.constant 0 : index
      %c0_13 = arith.constant 0 : index
      %13 = vector.load %arg5[%c0_12, %c0_13] : memref<1x96xf32, #tpu.memory_space<vmem>>, vector<1x96xf32>
      %14 = vector.broadcast %13 : vector<1x96xf32> to vector<14x96xf32>
      %15 = arith.addf %12, %14 : vector<14x96xf32>
      %c0_14 = arith.constant 0 : index
      %c0_15 = arith.constant 0 : index
      %16 = vector.load %arg6[%c0_14, %c0_15] : memref<14x96xf32, #tpu.memory_space<vmem>>, vector<14x96xf32>
      tpu.vector_store %arg6[%c0_14, %c0_15], %15 {strides = array<i32>} : memref<14x96xf32, #tpu.memory_space<vmem>>, vector<14x96xf32>,
    } else {
    }
    return
  }
  func.func @transform_0(%arg0: i32, %arg1: i32, %arg2: i32) -> (i32, i32) {
    %c0_i32 = arith.constant 0 : i32
    return %arg0, %arg2 : i32, i32
  }
  func.func @transform_1(%arg0: i32, %arg1: i32, %arg2: i32) -> (i32, i32) {
    %c0_i32 = arith.constant 0 : i32
    return %arg2, %arg1 : i32, i32
  }
  func.func @transform_2(%arg0: i32, %arg1: i32, %arg2: i32) -> (i32, i32) {
    %c0_i32 = arith.constant 0 : i32
    %c0_i32_0 = arith.constant 0 : i32
    return %c0_i32, %arg1 : i32, i32
  }
  func.func @transform_3(%arg0: i32, %arg1: i32, %arg2: i32) -> (i32, i32) {
    %c0_i32 = arith.constant 0 : i32
    return %arg0, %arg1 : i32, i32
  }
}

</mosaic_0001>

<llo_original>
// kernel: tpu_custom_call.1
$region0: #{tpu_custom_call.1}
  #allocation0 [shape = 'u32[]', space=smem, size = 0x4, offset = 0x4, fixed_abs, tag = 'smem constant byte address 0x4 - core index']
  #allocation1 [shape = 'u32[144,128]{1,0:T(1,128)}', space=vmem, size = 0x12000, scoped, tag = 'internal scratch']
  #allocation2 [shape = 'f32[14,96]{1,0:T(8,128)}', space=vmem, size = 0x2000, scoped, tag = 'scratch operand']
  %s0 = inlined_call_operand.hbm [shape: f32[14,32], index: 0, kind: input, shape index: {}]
  %s1 = inlined_call_operand.hbm [shape: f32[32,96], index: 1, kind: input, shape index: {}]
  %s2 = inlined_call_operand.vmem [shape: f32[1,96], index: 2, kind: input, shape index: {}]
  %s3 = inlined_call_operand.hbm [shape: f32[14,96], index: 3, kind: output, shape index: {}]
  %s4 = sld [smem:[#allocation0]]
  $region38: #{tpu_custom_call.1} parent=0
    _
  %s6 = ssub.s32 1, %s4
  %s7 = scalar_select 0, %s6, %s4
  $region1: #{tpu_custom_call.1} parent=0
    #allocation3 [shape = 'u8[8192]{0}', space=vmem, size = 0x2000, scoped, tag = 'input window, operand 0, single buffered']
    #allocation4 [shape = 's32[1]{0}', space=sflag, size = 0x4, scoped, tag = 'scoped memory for tpu_custom_call.1']
    #allocation5 [shape = 's32[1]{0}', space=sflag, size = 0x4, scoped, tag = 'scoped memory for tpu_custom_call.1']
    #allocation6 [shape = 'u8[16384]{0}', space=vmem, size = 0x4000, scoped, tag = 'input window, operand 1, single buffered']
    #allocation7 [shape = 's32[1]{0}', space=sflag, size = 0x4, scoped, tag = 'scoped memory for tpu_custom_call.1']
    #allocation8 [shape = 'u8[8192]{0}', space=vmem, size = 0x2000, scoped, tag = 'output window, operand 0, single buffered']
    %8 = vsyncpa [#allocation4], 0
    %9 = vsyncpa [#allocation7], 0
    %10 = vsyncpa [#allocation5], 0
    // Predicated region
    $region2: #{tpu_custom_call.1} parent=1 // pred_check
      _
    $region3: #{tpu_custom_call.1} parent=1 // pred_check_branch
      %12 = sbr.rel (0) target = $region5
    $region4: #{tpu_custom_call.1} parent=1 // pred_region
      %s14 = ssub.s32 256, 256
      %15 = vsyncadd [#allocation4], %s14
      %s16 = sshll.u32 [#allocation3], 4
      %s17 = int_to_ptr.vmem [resolvable:$true] %s16
      %22 = dma.hbm_to_vmem [thread:$0]  %s0, 256, %s17, [#allocation4], 128, 128, 8
    $region5: #{tpu_custom_call.1} parent=1 // pred_fallthru
      _
    // Predicated region
    $region6: #{tpu_custom_call.1} parent=1 // pred_check
      _
    $region7: #{tpu_custom_call.1} parent=1 // pred_check_branch
      %24 = sbr.rel (0) target = $region9
    $region8: #{tpu_custom_call.1} parent=1 // pred_region
      %s26 = ssub.s32 512, 512
      %27 = vsyncadd [#allocation7], %s26
      %s28 = sshll.u32 [#allocation6], 4
      %s29 = int_to_ptr.vmem [resolvable:$true] %s28
      %34 = dma.hbm_to_vmem [thread:$0]  %s1, 512, %s29, [#allocation7], 128, 128, 8
    $region9: #{tpu_custom_call.1} parent=1 // pred_fallthru
      _
    // Predicated region
    $region10: #{tpu_custom_call.1} parent=1 // pred_check
      _
    $region11: #{tpu_custom_call.1} parent=1 // pred_check_branch
      %36 = sbr.rel (0) target = $region13
    $region12: #{tpu_custom_call.1} parent=1 // pred_region
      _
    $region13: #{tpu_custom_call.1} parent=1 // pred_fallthru
      _
    // Predicated region
    $region14: #{tpu_custom_call.1} parent=1 // pred_check
      _
    $region15: #{tpu_custom_call.1} parent=1 // pred_check_branch
      %38 = sbr.rel (0) target = $region17
    $region16: #{tpu_custom_call.1} parent=1 // pred_region
      %39 = dma.done [#allocation4], 256
    $region17: #{tpu_custom_call.1} parent=1 // pred_fallthru
      _
    // Predicated region
    $region18: #{tpu_custom_call.1} parent=1 // pred_check
      _
    $region19: #{tpu_custom_call.1} parent=1 // pred_check_branch
      %41 = sbr.rel (0) target = $region21
    $region20: #{tpu_custom_call.1} parent=1 // pred_region
      %42 = dma.done [#allocation7], 512
    $region21: #{tpu_custom_call.1} parent=1 // pred_fallthru
      _
    %p43 = scmp.eq.s32.totalorder 0, 0
    // Predicated region
    $region22: #{tpu_custom_call.1} parent=1 // pred_check
      %p44 = pneg %p43
    $region23: #{tpu_custom_call.1} parent=1 // pred_check_branch
      %46 = sbr.rel (%p44) target = $region25
    $region24: #{tpu_custom_call.1} parent=1 // pred_region
      %vm47 = vcmask 785408
      %48 = vst.msk [vmem:[#allocation2] sm:$0xff] %vm47, 0.0
      %vm49 = vcmask 783360
      %50 = vst.msk [vmem:[#allocation2 + $0x8] sm:$0x3f] %vm49, 0.0
    $region25: #{tpu_custom_call.1} parent=1 // pred_fallthru
      _
    %v51 = vld [vmem:[#allocation2] sm:$0xff]
    %v52 = vld [vmem:[#allocation2 + $0x8] sm:$0x3f]
    %v53 = vld [vmem:[#allocation3] sm:$0xff]
    %v54 = vld [vmem:[#allocation3 + $0x8] sm:$0x3f]
    %v55 = vld [vmem:[#allocation6] sm:$0xff]
    %v56 = vld [vmem:[#allocation6 + $0x8] sm:$0xff]
    %v57 = vld [vmem:[#allocation6 + $0x10] sm:$0xff]
    %v58 = vld [vmem:[#allocation6 + $0x18] sm:$0xff]
    %vm59 = vcmask 261120
    %v61 = vsel %vm59, %v53, 0
    %v64 = vsel %vm59, %v54, 0
    %66 = vmatprep.subr.mxu0 0.0
    %67 = vmatpush1.msra.mxu0 0.0
    %68 = vmatprep.subr.mxu0 0.0
    %69 = vmatpush1.msra.mxu0 0.0
    %70 = vmatprep.subr.mxu0 0.0
    %71 = vmatpush1.msra.mxu0 0.0
    %72 = vmatprep.subr.mxu0 0.0
    %73 = vmatpush1.msra.mxu0 0.0
    %74 = vmatprep.subr.mxu0 0.0
    %75 = vmatpush1.msra.mxu0 0.0
    %76 = vmatprep.subr.mxu0 0.0
    %77 = vmatpush1.msra.mxu0 0.0
    %78 = vmatprep.subr.mxu0 0.0
    %79 = vmatpush1.msra.mxu0 0.0
    %80 = vmatprep.subr.mxu0 0.0
    %81 = vmatpush1.msra.mxu0 0.0
    %82 = vmatprep.subr.mxu0 0.0
    %83 = vmatpush1.msra.mxu0 0.0
    %84 = vmatprep.subr.mxu0 0.0
    %85 = vmatpush1.msra.mxu0 0.0
    %86 = vmatprep.subr.mxu0 0.0
    %87 = vmatpush1.msra.mxu0 0.0
    %88 = vmatprep.subr.mxu0 0.0
    %89 = vmatpush1.msra.mxu0 0.0
    %90 = vmatprep.subr.mxu0 0.0
    %91 = vmatpush1.msra.mxu0 %v58
    %92 = vmatprep.subr.mxu0 0.0
    %93 = vmatpush1.msra.mxu0 %v57
    %94 = vmatprep.subr.mxu0 0.0
    %95 = vmatpush1.msra.mxu0 %v56
    %96 = vmatprep.subr.mxu0 0.0
    %97 = vmatpush1.msra.mxu0 %v55
    %98 = vmatprep.subr.mxu0 0.0
    %99 = vmatpush2.msra.mxu0 0.0
    %100 = vmatprep.subr.mxu0 0.0
    %101 = vmatpush2.msra.mxu0 0.0
    %102 = vmatprep.subr.mxu0 0.0
    %103 = vmatpush2.msra.mxu0 0.0
    %104 = vmatprep.subr.mxu0 0.0
    %105 = vmatpush2.msra.mxu0 0.0
    %106 = vmatprep.subr.mxu0 0.0
    %107 = vmatpush2.msra.mxu0 0.0
    %108 = vmatprep.subr.mxu0 0.0
    %109 = vmatpush2.msra.mxu0 0.0
    %110 = vmatprep.subr.mxu0 0.0
    %111 = vmatpush2.msra.mxu0 0.0
    %112 = vmatprep.subr.mxu0 0.0
    %113 = vmatpush2.msra.mxu0 0.0
    %114 = vmatprep.subr.mxu0 0.0
    %115 = vmatpush2.msra.mxu0 0.0
    %116 = vmatprep.subr.mxu0 0.0
    %117 = vmatpush2.msra.mxu0 0.0
    %118 = vmatprep.subr.mxu0 0.0
    %119 = vmatpush2.msra.mxu0 0.0
    %120 = vmatprep.subr.mxu0 0.0
    %121 = vmatpush2.msra.mxu0 0.0
    %122 = vmatprep.subr.mxu0 0.0
    %123 = vmatpush2.msra.mxu0 0.0
    %124 = vmatprep.subr.mxu0 0.0
    %125 = vmatpush2.msra.mxu0 0.0
    %126 = vmatprep.subr.mxu0 0.0
    %127 = vmatpush2.msra.mxu0 0.0
    %128 = vmatprep.subr.mxu0 0.0
    %129 = vmatpush2.msra.mxu0 0.0
    %130 = vmatprep.mubr.f32.mxu0 0.0
    %131 = vmatmul.mubr.f32.gmra.mxu0 %v61
    %v132 = vpop.f32.mrf.mxu0
    %v133 = vadd.f32 0.0, %v132
    %v134 = vpop.f32.mrf.mxu0
    %135 = vmatprep.mubr.f32.mxu0 0.0
    %136 = vmatmul.mubr.f32.gmra.mxu0 %v64
    %v137 = vpop.f32.mrf.mxu0
    %v138 = vadd.f32 0.0, %v137
    %v139 = vpop.f32.mrf.mxu0
    %140 = vdwg.mxu0
    %v141 = vadd.f32 %v51, %v133
    %v142 = vadd.f32 %v52, %v138
    %vm143 = vcmask 785408
    %144 = vst.msk [vmem:[#allocation2] sm:$0xff] %vm143, %v141
    %vm145 = vcmask 783360
    %146 = vst.msk [vmem:[#allocation2 + $0x8] sm:$0x3f] %vm145, %v142
    // Predicated region
    $region26: #{tpu_custom_call.1} parent=1 // pred_check
      %p147 = pneg %p43
    $region27: #{tpu_custom_call.1} parent=1 // pred_check_branch
      %149 = sbr.rel (%p147) target = $region29
    $region28: #{tpu_custom_call.1} parent=1 // pred_region
      %v150 = vld [vmem:[#allocation2] sm:$0xff]
      %v151 = vld [vmem:[#allocation2 + $0x8] sm:$0x3f]
      %v152 = vld [vmem:[%s2] sm:$0x1]
      %v154 = vlaneseq
      %v155 = vshrl.u32 %v154, 7
      %v156 = vsub.s32 0, %v155
      %v157 = vrot.slane %v152, %v156
      %v159 = vadd.f32 %v150, %v157
      %v160 = vadd.f32 %v151, %v157
      %161 = vst.msk [vmem:[#allocation8] sm:$0xff] %vm143, %v159
      %162 = vst.msk [vmem:[#allocation8 + $0x8] sm:$0x3f] %vm145, %v160
    $region29: #{tpu_custom_call.1} parent=1 // pred_fallthru
      _
    // Predicated region
    $region30: #{tpu_custom_call.1} parent=1 // pred_check
      _
    $region31: #{tpu_custom_call.1} parent=1 // pred_check_branch
      %164 = sbr.rel (0) target = $region33
    $region32: #{tpu_custom_call.1} parent=1 // pred_region
      %s166 = ssub.s32 256, 256
      %167 = vsyncadd [#allocation5], %s166
      %s168 = sshll.u32 [#allocation8], 4
      %s169 = int_to_ptr.vmem [resolvable:$true] %s168
      %174 = dma.vmem_to_hbm [thread:$0]  %s169, 256, %s3, [#allocation5], 128, 128, 8
    $region33: #{tpu_custom_call.1} parent=1 // pred_fallthru
      _
    // Predicated region
    $region34: #{tpu_custom_call.1} parent=1 // pred_check
      _
    $region35: #{tpu_custom_call.1} parent=1 // pred_check_branch
      %176 = sbr.rel (0) target = $region37
    $region36: #{tpu_custom_call.1} parent=1 // pred_region
      %177 = dma.done [#allocation5], 256
    $region37: #{tpu_custom_call.1} parent=1 // pred_fallthru
      _
    %178 = vsyncpa [#allocation4], 1
    %179 = vsyncpa [#allocation7], 1
    %180 = vsyncpa [#allocation5], 1

</llo_original>
